<compile_context>
chip_gen: v7x
topology: tpu7x:2x2x1
jax: 0.10.0
libtpu: 0.0.40
codegen_flags: <defaults>
</compile_context>

<pallas_src>
from functools import partial

import jax
import jax.numpy as jnp
from jax.experimental import pallas as pl
from jax.experimental.pallas import tpu as pltpu


def decoder_kernel(tok_ref,        # SMEM (B,)       int32 token ids
                   emb_ref,        # VMEM (V, 2E)    f32 embedding table
                   state_ref,      # VMEM (B, 4H)    f32 packed state [h_f|h_b|c_f|c_b]
                   wblk_ref,       # VMEM (2E+2H,8H) bf16 packed LSTM weights (repacked cols)
                   bblk_ref,       # VMEM (1, 8H)    f32 folded biases (b_ih + b_hh)
                   wout_ref,       # VMEM (2H, Vp)   bf16 output projection
                   bout_ref,       # VMEM (1, Vp)    f32
                   logits_ref,     # VMEM (B, Vp)    f32 (lane-dense, Vp % 128 == 0)
                   state_new_ref,  # VMEM (B, 4H)    f32 (aliased with state_ref)
                   xh_ref):        # VMEM (B, 2E+2H) bf16 scratch: [relu(x) | h_f | h_b]
    B = state_ref.shape[0]
    H2 = state_ref.shape[-1] // 2        # 2*H (both directions packed)
    E2 = emb_ref.shape[-1]

    # ---- fused embedding gather: table is VMEM-resident, dynamic row reads (no DMAs) ----
    # dropout is identity in eval mode; ReLU applied to the embedded tokens only.
    # TODO(synk): training-mode dropout (p=0.5 random mask) not implemented; eval-mode only.
    for b in range(B):                   # B is tiny & static -> unrolled
        row = emb_ref[pl.ds(tok_ref[b], 1), :]                       # (1, 2E) f32
        xh_ref[b:b + 1, :E2] = jnp.maximum(row, 0.0).astype(jnp.bfloat16)
    # build the matmul operand in place (no jnp.concatenate): xh = [relu(x) | h_f | h_b]
    xh_ref[:, E2:] = state_ref[:, :H2].astype(jnp.bfloat16)

    # ---- single MXU call: all gate columns for both directions ----
    gates = (jnp.dot(xh_ref[...], wblk_ref[...], preferred_element_type=jnp.float32)
             + bblk_ref[...])                                        # (B, 8H) f32
    # packed gate column layout: [ i_f|i_b | f_f|f_b | o_f|o_b || g_f|g_b ]
    sig = jax.nn.sigmoid(gates[:, :3 * H2])   # sigmoid only over the sigmoid gates (6H)
    g = jnp.tanh(gates[:, 3 * H2:])           # tanh only over the g gates (2H)

    i_ = sig[:, :H2]
    f_ = sig[:, H2:2 * H2]
    o_ = sig[:, 2 * H2:]
    c_prev = state_ref[:, H2:]                # (B, 2H) f32 [c_f | c_b]

    # both directions' elementwise LSTM math fused into single (B, 2H) vector ops
    c_new = f_ * c_prev + i_ * g
    h_new = o_ * jnp.tanh(c_new)

    # lane-dense packed state writeback (128 lanes wide, aliased -> in-place update)
    state_new_ref[:, :H2] = h_new
    state_new_ref[:, H2:] = c_new

    # ---- single output-projection dot: [h_f|h_b] @ (2H, Vp) ----
    logits_ref[...] = (jnp.dot(h_new.astype(jnp.bfloat16), wout_ref[...],
                               preferred_element_type=jnp.float32)
                       + bout_ref[...])


@partial(jax.jit, donate_argnums=(1,))
def decoder_vanilla_forward(input_tok, state, params):
    """One DecoderVanilla.forward step (eval mode).

    state: packed (B, 4H) f32 [h_f|h_b|c_f|c_b]; returned logits (B, V) and new packed
    state (aliased in place with the donated input state).
    """
    emb = params["embedding"]                 # (V, 2E) f32, VMEM-resident
    V, E2 = emb.shape
    B = input_tok.shape[0]
    H4 = state.shape[-1]
    Vp = params["w_out"].shape[-1]

    tok = jnp.clip(input_tok.astype(jnp.int32), 0, V - 1)   # guard against OOB token ids

    vmem = pl.BlockSpec(memory_space=pltpu.MemorySpace.VMEM)
    smem = pl.BlockSpec(memory_space=pltpu.MemorySpace.SMEM)

    logits_p, state_new = pl.pallas_call(
        decoder_kernel,
        out_shape=(jax.ShapeDtypeStruct((B, Vp), jnp.float32),
                   jax.ShapeDtypeStruct((B, H4), jnp.float32)),
        in_specs=[smem, vmem, vmem, vmem, vmem, vmem, vmem],
        out_specs=(vmem, vmem),
        scratch_shapes=[pltpu.VMEM((B, E2 + H4 // 2), jnp.bfloat16)],
        # in-place recurrent state update (real, since `state` is donated under jit)
        input_output_aliases={2: 1},
    )(tok, emb, state, params["w_blk"], params["b_blk"],
      params["w_out"], params["b_out"])
    return logits_p[:, :V], state_new


def pack_state(hidden, cell):
    """(2, B, H) hidden/cell (PyTorch layout) -> lane-dense (B, 4H) [h_f|h_b|c_f|c_b]."""
    return jnp.concatenate([hidden[0], hidden[1], cell[0], cell[1]], axis=-1)


def unpack_state(state, hidden_size):
    """(B, 4H) packed state -> ((2, B, H) hidden, (2, B, H) cell)."""
    H = hidden_size
    h = jnp.stack([state[:, :H], state[:, H:2 * H]])
    c = jnp.stack([state[:, 2 * H:3 * H], state[:, 3 * H:]])
    return h, c


def make_params(key, hidden_size, vocab_size, embed_size):
    E2 = embed_size * 2
    H = hidden_size
    V = vocab_size
    Vp = ((V + 127) // 128) * 128             # lane-dense logits store
    ks = jax.random.split(key, 8)
    scale = 0.1

    embedding = scale * jax.random.normal(ks[0], (V, E2), jnp.float32)
    embedding = embedding.at[0].set(0.0)                       # padding_idx=0

    # PyTorch LSTM params per direction: W_ih (4H, 2E), W_hh (4H, H), biases (4H,)
    # (per-direction gate row order: i, f, g, o)
    w_ih = scale * jax.random.normal(ks[1], (2, 4 * H, E2), jnp.float32)
    w_hh = scale * jax.random.normal(ks[2], (2, 4 * H, H), jnp.float32)
    b_ih = scale * jax.random.normal(ks[3], (2, 4 * H), jnp.float32)
    b_hh = scale * jax.random.normal(ks[4], (2, 4 * H), jnp.float32)

    # out_linear: weight (V, 2H), bias (V,)
    w_out = scale * jax.random.normal(ks[5], (V, 2 * H), jnp.float32)
    b_out = scale * jax.random.normal(ks[6], (V,), jnp.float32)

    # ---- pack for the kernel ----
    w_ih_t = jnp.transpose(w_ih, (0, 2, 1))   # (2, 2E, 4H)
    w_hh_t = jnp.transpose(w_hh, (0, 2, 1))   # (2, H, 4H)

    # block weight (2E+2H, 8H), old column layout: [fwd i|f|g|o , bwd i|f|g|o]
    w_blk = jnp.zeros((E2 + 2 * H, 8 * H), jnp.float32)
    w_blk = w_blk.at[:E2, :4 * H].set(w_ih_t[0])
    w_blk = w_blk.at[:E2, 4 * H:].set(w_ih_t[1])
    w_blk = w_blk.at[E2:E2 + H, :4 * H].set(w_hh_t[0])      # h_fwd rows (fwd gates only)
    w_blk = w_blk.at[E2 + H:, 4 * H:].set(w_hh_t[1])        # h_bwd rows (bwd gates only)
    b_blk = jnp.concatenate([b_ih[0] + b_hh[0], b_ih[1] + b_hh[1]])[None, :]   # (1, 8H)

    # column repack -> [ i_f|i_b | f_f|f_b | o_f|o_b || g_f|g_b ]
    # (sigmoid gates contiguous in the first 6H cols, tanh gates in the last 2H cols)
    def gate_cols(direction, gate):           # gate: 0=i, 1=f, 2=g, 3=o
        base = 4 * H * direction + H * gate
        return jnp.arange(base, base + H)
    perm = jnp.concatenate([
        gate_cols(0, 0), gate_cols(1, 0),     # i_f, i_b
        gate_cols(0, 1), gate_cols(1, 1),     # f_f, f_b
        gate_cols(0, 3), gate_cols(1, 3),     # o_f, o_b
        gate_cols(0, 2), gate_cols(1, 2),     # g_f, g_b
    ])
    w_blk = w_blk[:, perm]
    b_blk = b_blk[:, perm]

    # single output projection [h_f|h_b] @ (2H, Vp); V padded to Vp lanes
    w_out_p = jnp.zeros((2 * H, Vp), jnp.float32).at[:, :V].set(w_out.T)
    b_out_p = jnp.zeros((1, Vp), jnp.float32).at[0, :V].set(b_out)

    return {
        "embedding": embedding,                        # (V, 2E) f32, VMEM-resident
        "w_blk": w_blk.astype(jnp.bfloat16),           # (2E+2H, 8H) bf16, repacked cols
        "b_blk": b_blk,                                # (1, 8H) f32, b_ih + b_hh folded
        "w_out": w_out_p.astype(jnp.bfloat16),         # (2H, Vp) bf16
        "b_out": b_out_p,                              # (1, Vp) f32
    }


def reference_forward(input_tok, hidden, cell, params):
    """Pure-JAX reference replicating the PyTorch module (eval-mode dropout), using the
    same packed params and the same bf16 rounding of matmul operands as the kernel
    (f32 accumulation)."""
    H = hidden.shape[-1]
    emb = params["embedding"]
    V = emb.shape[0]
    tok = jnp.clip(input_tok.astype(jnp.int32), 0, V - 1)

    x = jnp.maximum(jnp.take(emb, tok, axis=0), 0.0)          # dropout(eval)=identity; ReLU
    xh = jnp.concatenate([x, hidden[0], hidden[1]], axis=-1)
    xh = xh.astype(jnp.bfloat16).astype(jnp.float32)          # mirror kernel bf16 operand
    gates = jnp.dot(xh, params["w_blk"].astype(jnp.float32),
                    precision=jax.lax.Precision.HIGHEST) + params["b_blk"]

    s = jax.nn.sigmoid(gates[:, :6 * H])
    g = jnp.tanh(gates[:, 6 * H:])
    i_ = s[:, :2 * H]
    f_ = s[:, 2 * H:4 * H]
    o_ = s[:, 4 * H:]
    c_prev = jnp.concatenate([cell[0], cell[1]], axis=-1)     # (B, 2H) [c_f|c_b]

    c_new = f_ * c_prev + i_ * g
    h_new = o_ * jnp.tanh(c_new)

    logits = (jnp.dot(h_new.astype(jnp.bfloat16).astype(jnp.float32),
                      params["w_out"].astype(jnp.float32),
                      precision=jax.lax.Precision.HIGHEST)
              + params["b_out"])[:, :V]

    hidden_new = jnp.stack([h_new[:, :H], h_new[:, H:]])
    cell_new = jnp.stack([c_new[:, :H], c_new[:, H:]])
    return logits, (hidden_new, cell_new)


if __name__ == "__main__":
    hidden_size = 32
    vocab_size = 64
    embed_size = 16
    batch = 2
    n_layers = 1

    key = jax.random.PRNGKey(0)
    kp, kt, kh, kc = jax.random.split(key, 4)

    params = make_params(kp, hidden_size, vocab_size, embed_size)
    input_tok = jax.random.randint(kt, (batch,), 0, vocab_size, dtype=jnp.int32)
    hidden = 0.1 * jax.random.normal(kh, (2 * n_layers, batch, hidden_size), jnp.float32)
    cell = 0.1 * jax.random.normal(kc, (2 * n_layers, batch, hidden_size), jnp.float32)

    # lane-dense packed recurrent state (donated + aliased in-place by the kernel call)
    state = pack_state(hidden, cell)

    logits, state_new = decoder_vanilla_forward(input_tok, state, params)
    jax.block_until_ready((logits, state_new))
    h_new, c_new = unpack_state(state_new, hidden_size)       # back to PyTorch layout

    ref_logits, (ref_h, ref_c) = reference_forward(input_tok, hidden, cell, params)

    assert logits.shape == (batch, vocab_size)
    assert jnp.allclose(logits, ref_logits, atol=1e-3), \
        float(jnp.max(jnp.abs(logits - ref_logits)))
    assert jnp.allclose(h_new, ref_h, atol=1e-4), float(jnp.max(jnp.abs(h_new - ref_h)))
    assert jnp.allclose(c_new, ref_c, atol=1e-4), float(jnp.max(jnp.abs(c_new - ref_c)))

    print("KERNEL_OK")
</pallas_src>

<mosaic_0001>
module attributes {stable_mosaic.version = 11 : i64} {
  func.func @decoder_kernel(%arg0: memref<2xi32, #tpu.memory_space<smem>>, %arg1: memref<64x32xf32, #tpu.memory_space<vmem>>, %arg2: memref<2x128xf32, #tpu.memory_space<vmem>>, %arg3: memref<96x256xbf16, #tpu.memory_space<vmem>>, %arg4: memref<1x256xf32, #tpu.memory_space<vmem>>, %arg5: memref<64x128xbf16, #tpu.memory_space<vmem>>, %arg6: memref<1x128xf32, #tpu.memory_space<vmem>>, %arg7: memref<2x128xf32, #tpu.memory_space<vmem>>, %arg8: memref<2x128xf32, #tpu.memory_space<vmem>>, %arg9: memref<2x96xbf16, #tpu.memory_space<vmem>>) attributes {dimension_semantics = [], scalar_prefetch = 0 : i64, scratch_operands = 1 : i64, tpu.core_type = #tpu.core_type<tc>} {
    %c0 = arith.constant 0 : index
    %0 = memref.load %arg0[%c0] : memref<2xi32, #tpu.memory_space<smem>>
    %1 = arith.index_cast %0 : i32 to index
    %c0_0 = arith.constant 0 : index
    %2 = vector.load %arg1[%1, %c0_0] : memref<64x32xf32, #tpu.memory_space<vmem>>, vector<1x32xf32>
    %cst = arith.constant 0.000000e+00 : f32
    %3 = vector.broadcast %cst : f32 to vector<1x32xf32>
    %4 = arith.maximumf %2, %3 : vector<1x32xf32>
    %5 = arith.truncf %4 : vector<1x32xf32> to vector<1x32xbf16>
    %c0_1 = arith.constant 0 : index
    %c0_2 = arith.constant 0 : index
    %6 = vector.load %arg9[%c0_1, %c0_2] : memref<2x96xbf16, #tpu.memory_space<vmem>>, vector<1x32xbf16>
    tpu.vector_store %arg9[%c0_1, %c0_2], %5 {strides = array<i32>} : memref<2x96xbf16, #tpu.memory_space<vmem>>, vector<1x32xbf16>,
    %c1 = arith.constant 1 : index
    %7 = memref.load %arg0[%c1] : memref<2xi32, #tpu.memory_space<smem>>
    %8 = arith.index_cast %7 : i32 to index
    %c0_3 = arith.constant 0 : index
    %9 = vector.load %arg1[%8, %c0_3] : memref<64x32xf32, #tpu.memory_space<vmem>>, vector<1x32xf32>
    %cst_4 = arith.constant 0.000000e+00 : f32
    %10 = vector.broadcast %cst_4 : f32 to vector<1x32xf32>
    %11 = arith.maximumf %9, %10 : vector<1x32xf32>
    %12 = arith.truncf %11 : vector<1x32xf32> to vector<1x32xbf16>
    %c1_5 = arith.constant 1 : index
    %c0_6 = arith.constant 0 : index
    %13 = vector.load %arg9[%c1_5, %c0_6] : memref<2x96xbf16, #tpu.memory_space<vmem>>, vector<1x32xbf16>
    tpu.vector_store %arg9[%c1_5, %c0_6], %12 {strides = array<i32>} : memref<2x96xbf16, #tpu.memory_space<vmem>>, vector<1x32xbf16>,
    %c0_7 = arith.constant 0 : index
    %c0_8 = arith.constant 0 : index
    %14 = vector.load %arg2[%c0_7, %c0_8] : memref<2x128xf32, #tpu.memory_space<vmem>>, vector<2x64xf32>
    %15 = arith.truncf %14 : vector<2x64xf32> to vector<2x64xbf16>
    %c0_9 = arith.constant 0 : index
    %c32 = arith.constant 32 : index
    %16 = vector.load %arg9[%c0_9, %c32] : memref<2x96xbf16, #tpu.memory_space<vmem>>, vector<2x64xbf16>
    tpu.vector_store %arg9[%c0_9, %c32], %15 {strides = array<i32>} : memref<2x96xbf16, #tpu.memory_space<vmem>>, vector<2x64xbf16>,
    %c0_10 = arith.constant 0 : index
    %c0_11 = arith.constant 0 : index
    %17 = vector.load %arg9[%c0_10, %c0_11] : memref<2x96xbf16, #tpu.memory_space<vmem>>, vector<2x96xbf16>
    %c0_12 = arith.constant 0 : index
    %c0_13 = arith.constant 0 : index
    %18 = vector.load %arg3[%c0_12, %c0_13] : memref<96x256xbf16, #tpu.memory_space<vmem>>, vector<96x256xbf16>
    %cst_14 = arith.constant dense<0.000000e+00> : vector<2x256xf32>
    %19 = tpu.matmul %17, %18, %cst_14 {dimension_numbers = #tpu.dot_dimension_numbers<[1], [0], [0], [1], [0, 0, 1, 1], [], []>} : vector<2x96xbf16>, vector<96x256xbf16>, vector<2x256xf32> -> vector<2x256xf32>
    %c0_15 = arith.constant 0 : index
    %c0_16 = arith.constant 0 : index
    %20 = vector.load %arg4[%c0_15, %c0_16] : memref<1x256xf32, #tpu.memory_space<vmem>>, vector<1x256xf32>
    %21 = vector.broadcast %20 : vector<1x256xf32> to vector<2x256xf32>
    %22 = arith.addf %19, %21 : vector<2x256xf32>
    %23 = vector.extract_strided_slice %22 {offsets = [0, 0], sizes = [2, 192], strides = [1, 1]} : vector<2x256xf32> to vector<2x192xf32>
    %24 = arith.negf %23 : vector<2x192xf32>
    %25 = math.exp %24 : vector<2x192xf32>
    %cst_17 = arith.constant 1.000000e+00 : f32
    %26 = vector.broadcast %cst_17 : f32 to vector<2x192xf32>
    %27 = arith.addf %26, %25 : vector<2x192xf32>
    %28 = arith.divf %26, %27 : vector<2x192xf32>
    %29 = vector.extract_strided_slice %22 {offsets = [0, 192], sizes = [2, 64], strides = [1, 1]} : vector<2x256xf32> to vector<2x64xf32>
    %30 = math.tanh %29 : vector<2x64xf32>
    %31 = vector.extract_strided_slice %28 {offsets = [0, 0], sizes = [2, 64], strides = [1, 1]} : vector<2x192xf32> to vector<2x64xf32>
    %32 = vector.extract_strided_slice %28 {offsets = [0, 64], sizes = [2, 64], strides = [1, 1]} : vector<2x192xf32> to vector<2x64xf32>
    %33 = vector.extract_strided_slice %28 {offsets = [0, 128], sizes = [2, 64], strides = [1, 1]} : vector<2x192xf32> to vector<2x64xf32>
    %c0_18 = arith.constant 0 : index
    %c64 = arith.constant 64 : index
    %34 = vector.load %arg2[%c0_18, %c64] : memref<2x128xf32, #tpu.memory_space<vmem>>, vector<2x64xf32>
    %35 = arith.mulf %32, %34 : vector<2x64xf32>
    %36 = arith.mulf %31, %30 : vector<2x64xf32>
    %37 = arith.addf %35, %36 : vector<2x64xf32>
    %38 = math.tanh %37 : vector<2x64xf32>
    %39 = arith.mulf %33, %38 : vector<2x64xf32>
    %c0_19 = arith.constant 0 : index
    %c0_20 = arith.constant 0 : index
    %40 = vector.load %arg8[%c0_19, %c0_20] : memref<2x128xf32, #tpu.memory_space<vmem>>, vector<2x64xf32>
    tpu.vector_store %arg8[%c0_19, %c0_20], %39 {strides = array<i32>} : memref<2x128xf32, #tpu.memory_space<vmem>>, vector<2x64xf32>,
    %c0_21 = arith.constant 0 : index
    %c64_22 = arith.constant 64 : index
    %41 = vector.load %arg8[%c0_21, %c64_22] : memref<2x128xf32, #tpu.memory_space<vmem>>, vector<2x64xf32>
    tpu.vector_store %arg8[%c0_21, %c64_22], %37 {strides = array<i32>} : memref<2x128xf32, #tpu.memory_space<vmem>>, vector<2x64xf32>,
    %42 = arith.truncf %39 : vector<2x64xf32> to vector<2x64xbf16>
    %c0_23 = arith.constant 0 : index
    %c0_24 = arith.constant 0 : index
    %43 = vector.load %arg5[%c0_23, %c0_24] : memref<64x128xbf16, #tpu.memory_space<vmem>>, vector<64x128xbf16>
    %cst_25 = arith.constant dense<0.000000e+00> : vector<2x128xf32>
    %44 = tpu.matmul %42, %43, %cst_25 {dimension_numbers = #tpu.dot_dimension_numbers<[1], [0], [0], [1], [0, 0, 1, 1], [], []>} : vector<2x64xbf16>, vector<64x128xbf16>, vector<2x128xf32> -> vector<2x128xf32>
    %c0_26 = arith.constant 0 : index
    %c0_27 = arith.constant 0 : index
    %45 = vector.load %arg6[%c0_26, %c0_27] : memref<1x128xf32, #tpu.memory_space<vmem>>, vector<1x128xf32>
    %46 = vector.broadcast %45 : vector<1x128xf32> to vector<2x128xf32>
    %47 = arith.addf %44, %46 : vector<2x128xf32>
    %c0_28 = arith.constant 0 : index
    %c0_29 = arith.constant 0 : index
    %48 = vector.load %arg7[%c0_28, %c0_29] : memref<2x128xf32, #tpu.memory_space<vmem>>, vector<2x128xf32>
    tpu.vector_store %arg7[%c0_28, %c0_29], %47 {strides = array<i32>} : memref<2x128xf32, #tpu.memory_space<vmem>>, vector<2x128xf32>,
    return
  }
}

</mosaic_0001>

<llo_original>
// kernel: decoder_vanilla_forward.1
$region0: #{decoder_vanilla_forward.1}
  #allocation0 [shape = 'u32[]', space=smem, size = 0x4, offset = 0x4, fixed_abs, tag = 'smem constant byte address 0x4 - core index']
  #allocation1 [shape = 'u32[144,128]{1,0:T(1,128)}', space=vmem, size = 0x12000, scoped, tag = 'internal scratch']
  #allocation2 [shape = 'bf16[2,96]{1,0:T(2,128)(2,1)}', space=vmem, size = 0x200, scoped, tag = 'scratch operand']
  %s0 = inlined_call_operand.vmem [shape: s32[2], index: 0, kind: input, shape index: {}]
  %s1 = inlined_call_operand.vmem [shape: f32[64,32], index: 1, kind: input, shape index: {}]
  %s2 = inlined_call_operand.vmem [shape: f32[2,128], index: 2, kind: input, shape index: {}, may-alias: {2,8}]
  %s3 = inlined_call_operand.vmem [shape: bf16[96,256], index: 3, kind: input, shape index: {}]
  %s4 = inlined_call_operand.vmem [shape: f32[1,256], index: 4, kind: input, shape index: {}]
  %s5 = inlined_call_operand.hbm [shape: bf16[64,128], index: 5, kind: input, shape index: {}]
  %s6 = inlined_call_operand.vmem [shape: f32[1,128], index: 6, kind: input, shape index: {}]
  %s7 = inlined_call_operand.hbm [shape: f32[2,128], index: 7, kind: output, shape index: {0}]
  %s8 = inlined_call_operand.vmem [shape: f32[2,128], index: 8, kind: output, shape index: {1}, may-alias: {2,8}]
  %9 = xla_tuple %s7, %s8
  %s10 = sld [smem:[#allocation0]]
  $region54: #{decoder_vanilla_forward.1} parent=0
    _
  %s12 = ssub.s32 1, %s10
  %s13 = scalar_select 0, %s12, %s10
  $region1: #{decoder_vanilla_forward.1} parent=0
    #allocation3 [shape = 'u8[512]{0}', space=smem, size = 0x200, scoped, tag = 'input window, operand 0, single buffered']
    #allocation4 [shape = 's32[1]{0}', space=sflag, size = 0x4, scoped, tag = 'scoped memory for decoder_vanilla_forward.1']
    #allocation5 [shape = 's32[1]{0}', space=sflag, size = 0x4, scoped, tag = 'scoped memory for decoder_vanilla_forward.1']
    #allocation6 [shape = 's32[1]{0}', space=sflag, size = 0x4, scoped, tag = 'scoped memory for decoder_vanilla_forward.1']
    #allocation7 [shape = 'u8[16384]{0}', space=vmem, size = 0x4000, scoped, tag = 'input window, operand 5, single buffered']
    #allocation8 [shape = 'u8[1024]{0}', space=vmem, size = 0x400, scoped, tag = 'output window, operand 0, single buffered']
    %14 = vsyncpa [#allocation6], 0
    %15 = vsyncpa [#allocation4], 0
    %16 = vsyncpa [#allocation5], 0
    // Predicated region
    $region2: #{decoder_vanilla_forward.1} parent=1 // pred_check
      _
    $region3: #{decoder_vanilla_forward.1} parent=1 // pred_check_branch
      %18 = sbr.rel (0) target = $region5
    $region4: #{decoder_vanilla_forward.1} parent=1 // pred_region
      %s20 = ssub.s32 16, 16
      %21 = vsyncadd [#allocation6], %s20
      %s23 = sshll.u32 %s0, 4
      %s24 = int_to_ptr.vmem [resolvable:$true] %s23
      %26 = dma.vmem_to_smem %s24, 16, [#allocation3], [#allocation6]
    $region5: #{decoder_vanilla_forward.1} parent=1 // pred_fallthru
      _
    // Predicated region
    $region6: #{decoder_vanilla_forward.1} parent=1 // pred_check
      _
    $region7: #{decoder_vanilla_forward.1} parent=1 // pred_check_branch
      %28 = sbr.rel (0) target = $region9
    $region8: #{decoder_vanilla_forward.1} parent=1 // pred_region
      _
    $region9: #{decoder_vanilla_forward.1} parent=1 // pred_fallthru
      _
    // Predicated region
    $region10: #{decoder_vanilla_forward.1} parent=1 // pred_check
      _
    $region11: #{decoder_vanilla_forward.1} parent=1 // pred_check_branch
      %30 = sbr.rel (0) target = $region13
    $region12: #{decoder_vanilla_forward.1} parent=1 // pred_region
      _
    $region13: #{decoder_vanilla_forward.1} parent=1 // pred_fallthru
      _
    // Predicated region
    $region14: #{decoder_vanilla_forward.1} parent=1 // pred_check
      _
    $region15: #{decoder_vanilla_forward.1} parent=1 // pred_check_branch
      %32 = sbr.rel (0) target = $region17
    $region16: #{decoder_vanilla_forward.1} parent=1 // pred_region
      _
    $region17: #{decoder_vanilla_forward.1} parent=1 // pred_fallthru
      _
    // Predicated region
    $region18: #{decoder_vanilla_forward.1} parent=1 // pred_check
      _
    $region19: #{decoder_vanilla_forward.1} parent=1 // pred_check_branch
      %34 = sbr.rel (0) target = $region21
    $region20: #{decoder_vanilla_forward.1} parent=1 // pred_region
      _
    $region21: #{decoder_vanilla_forward.1} parent=1 // pred_fallthru
      _
    // Predicated region
    $region22: #{decoder_vanilla_forward.1} parent=1 // pred_check
      _
    $region23: #{decoder_vanilla_forward.1} parent=1 // pred_check_branch
      %36 = sbr.rel (0) target = $region25
    $region24: #{decoder_vanilla_forward.1} parent=1 // pred_region
      %s38 = ssub.s32 512, 512
      %39 = vsyncadd [#allocation4], %s38
      %s40 = sshll.u32 [#allocation7], 4
      %s41 = int_to_ptr.vmem [resolvable:$true] %s40
      %46 = dma.hbm_to_vmem [thread:$0]  %s5, 512, %s41, [#allocation4], 64, 64, 4
    $region25: #{decoder_vanilla_forward.1} parent=1 // pred_fallthru
      _
    // Predicated region
    $region26: #{decoder_vanilla_forward.1} parent=1 // pred_check
      _
    $region27: #{decoder_vanilla_forward.1} parent=1 // pred_check_branch
      %48 = sbr.rel (0) target = $region29
    $region28: #{decoder_vanilla_forward.1} parent=1 // pred_region
      _
    $region29: #{decoder_vanilla_forward.1} parent=1 // pred_fallthru
      _
    // Predicated region
    $region30: #{decoder_vanilla_forward.1} parent=1 // pred_check
      _
    $region31: #{decoder_vanilla_forward.1} parent=1 // pred_check_branch
      %50 = sbr.rel (0) target = $region33
    $region32: #{decoder_vanilla_forward.1} parent=1 // pred_region
      %51 = dma.done [#allocation6], 16
    $region33: #{decoder_vanilla_forward.1} parent=1 // pred_fallthru
      _
    // Predicated region
    $region34: #{decoder_vanilla_forward.1} parent=1 // pred_check
      _
    $region35: #{decoder_vanilla_forward.1} parent=1 // pred_check_branch
      %53 = sbr.rel (0) target = $region37
    $region36: #{decoder_vanilla_forward.1} parent=1 // pred_region
      %54 = dma.done [#allocation4], 512
    $region37: #{decoder_vanilla_forward.1} parent=1 // pred_fallthru
      _
    %55 = sfence
    %s57 = sld [smem:[#allocation3]]
    %s58 = scalar_lea.vmem %s1, %s57
    %v59 = vld [vmem:[%s58] sm:$0x1]
    %v60 = vmax.f32 %v59, 0.0
    %v61 = vpack.c.bf16 %v60, %v60
    %vm62 = vcmask 253952
    %vm63 = vsmask.f32 256
    %vm64 = vmand %vm62, %vm63
    %v65 = vld [vmem:[#allocation2] sm:$0x1]
    %v66 = vsel %vm64, %v61, %v65
    %67 = vst [vmem:[#allocation2] sm:$0x1] %v66
    %s68 = sld [smem:[#allocation3 + $0x1]]
    %s69 = scalar_lea.vmem %s1, %s68
    %v70 = vld [vmem:[%s69] sm:$0x1]
    %v71 = vmax.f32 %v70, 0.0
    %v72 = vpack.c.bf16 %v71, %v71
    %v75 = vunpack.c.l.s4 1966171168
    %v76 = vunpack.c.0.s8 %v75
    %v77 = vlaneseq
    %v78 = vshrl.u32 %v77, 7
    %v79 = vsub.s32 %v76, %v78
    %v80 = vrot.slane %v72, %v79
    %v82 = vunpack.c.l.s4 1966171168
    %v83 = vunpack.c.0.s8 %v82
    %v84 = vlaneseq
    %v85 = vshrl.u32 %v84, 7
    %v86 = vsub.s32 %v83, %v85
    %v87 = vrot.slane %v80, %v86
    %v89 = vshll.u32 %v87, 16
    %vm92 = vsmask.f32 7938
    %vm93 = vmand %vm62, %vm92
    %v94 = vld [vmem:[#allocation2] sm:$0x1]
    %v95 = vsel %vm93, %v89, %v94
    %96 = vst [vmem:[#allocation2] sm:$0x1] %v95
    %v97 = vld [vmem:[%s2] sm:$0x3]
    %v98 = vpack.c.bf16 %v97, %v97
    %v101 = vunpack.c.l.s4 1966171168
    %v102 = vunpack.c.0.s8 %v101
    %v103 = vlaneseq
    %v104 = vshrl.u32 %v103, 7
    %v105 = vsub.s32 %v102, %v104
    %v106 = vrot.slane %v98, %v105
    %v108 = vunpack.c.l.s4 1966171168
    %v109 = vunpack.c.0.s8 %v108
    %v110 = vlaneseq
    %v111 = vshrl.u32 %v110, 7
    %v112 = vsub.s32 %v109, %v111
    %v113 = vrot.slane %v106, %v112
    %114 = vrot.lane.b32.xlu0 %v113, 32
    %v115 = vpop.permute.xlu0 %114
    %vm117 = vcmask 778496
    %118 = vst.msk [vmem:[#allocation2] sm:$0x1] %vm117, %v115
    %v119 = vld [vmem:[#allocation2] sm:$0x1]
    %v120 = vld [vmem:[%s3] sm:$0xff]
    %v121 = vld [vmem:[%s3 + $0x8] sm:$0xff]
    %v122 = vld [vmem:[%s3 + $0x10] sm:$0xff]
    %v123 = vld [vmem:[%s3 + $0x18] sm:$0xff]
    %v124 = vld [vmem:[%s3 + $0x20] sm:$0xff]
    %v125 = vld [vmem:[%s3 + $0x28] sm:$0xff]
    %v126 = vld [vmem:[%s3 + $0x30] sm:$0xff]
    %v127 = vld [vmem:[%s3 + $0x38] sm:$0xff]
    %v128 = vld [vmem:[%s3 + $0x40] sm:$0xff]
    %v129 = vld [vmem:[%s3 + $0x48] sm:$0xff]
    %v130 = vld [vmem:[%s3 + $0x50] sm:$0xff]
    %v131 = vld [vmem:[%s3 + $0x58] sm:$0xff]
    %v132 = vld [vmem:[%s4] sm:$0x3]
    %v134 = vlaneseq
    %v135 = vshrl.u32 %v134, 7
    %v136 = vsub.s32 0, %v135
    %v137 = vrot.slane %v132, %v136
    %v138 = vlaneseq
    %v139 = vshrl.u32 %v138, 7
    %v140 = vsub.s32 1, %v139
    %v141 = vrot.slane %v132, %v140
    %v156 = vunpack.c.l.b16 %v120
    %v157 = vunpack.c.h.b16 %v120
    %v158 = vunpack.c.l.b16 %v121
    %v159 = vunpack.c.h.b16 %v121
    %v160 = vunpack.c.l.b16 %v122
    %v161 = vunpack.c.h.b16 %v122
    %v162 = vunpack.c.l.b16 %v123
    %v163 = vunpack.c.h.b16 %v123
    %v164 = vunpack.c.l.b16 %v124
    %v165 = vunpack.c.h.b16 %v124
    %v166 = vunpack.c.l.b16 %v125
    %v167 = vunpack.c.h.b16 %v125
    %v168 = vunpack.c.l.b16 %v126
    %v169 = vunpack.c.h.b16 %v126
    %v170 = vunpack.c.l.b16 %v127
    %v171 = vunpack.c.h.b16 %v127
    %v172 = vunpack.c.l.b16 %v128
    %v173 = vunpack.c.h.b16 %v128
    %v174 = vunpack.c.l.b16 %v129
    %v175 = vunpack.c.h.b16 %v129
    %v176 = vunpack.c.l.b16 %v130
    %v177 = vunpack.c.h.b16 %v130
    %v178 = vunpack.c.l.b16 %v131
    %v179 = vunpack.c.h.b16 %v131
    %v180 = vpack.c.b16 %v158, %v156
    %v181 = vpack.c.b16 %v159, %v157
    %v182 = vpack.c.b16 %v162, %v160
    %v183 = vpack.c.b16 %v163, %v161
    %v184 = vpack.c.b16 %v166, %v164
    %v185 = vpack.c.b16 %v167, %v165
    %v186 = vpack.c.b16 %v170, %v168
    %v187 = vpack.c.b16 %v171, %v169
    %v188 = vpack.c.b16 %v174, %v172
    %v189 = vpack.c.b16 %v175, %v173
    %v190 = vpack.c.b16 %v178, %v176
    %v191 = vpack.c.b16 %v179, %v177
    %vm204 = vcmask 785408
    %v206 = vsel %vm204, %v119, 0
    %208 = vmatprep.subr.bf16.mxu0 %v181
    %209 = vmatpush1.bf16.msra.mxu0 %v180
    %210 = vmatprep.subr.bf16.mxu0 %v183
    %211 = vmatpush1.bf16.msra.mxu0 %v182
    %212 = vmatprep.subr.bf16.mxu0 %v185
    %213 = vmatpush1.bf16.msra.mxu0 %v184
    %214 = vmatprep.subr.bf16.mxu0 %v187
    %215 = vmatpush1.bf16.msra.mxu0 %v186
    %216 = vmatprep.subr.bf16.mxu0 %v189
    %217 = vmatpush1.bf16.msra.mxu0 %v188
    %218 = vmatprep.subr.bf16.mxu0 %v191
    %219 = vmatpush1.bf16.msra.mxu0 %v190
    %220 = vmatprep.subr.bf16.mxu0 0
    %221 = vmatpush1.bf16.msra.mxu0 0
    %222 = vmatprep.subr.bf16.mxu0 0
    %223 = vmatpush1.bf16.msra.mxu0 0
    %224 = vmatprep.subr.bf16.mxu0 0
    %225 = vmatpush1.bf16.msra.mxu0 0
    %226 = vmatprep.subr.bf16.mxu0 0
    %227 = vmatpush1.bf16.msra.mxu0 0
    %228 = vmatprep.subr.bf16.mxu0 0
    %229 = vmatpush1.bf16.msra.mxu0 0
    %230 = vmatprep.subr.bf16.mxu0 0
    %231 = vmatpush1.bf16.msra.mxu0 0
    %232 = vmatprep.subr.bf16.mxu0 0
    %233 = vmatpush1.bf16.msra.mxu0 0
    %234 = vmatprep.subr.bf16.mxu0 0
    %235 = vmatpush1.bf16.msra.mxu0 0
    %236 = vmatprep.subr.bf16.mxu0 0
    %237 = vmatpush1.bf16.msra.mxu0 0
    %238 = vmatprep.subr.bf16.mxu0 0
    %239 = vmatpush1.bf16.msra.mxu0 0
    %240 = vmatprep.mubr.bf16.mxu0 0
    %241 = vmatmul.mubr.bf16.gmra.mrb[0].mxu0 %v206
    %v242 = vpop.f32.mrb[0].mxu0
    %v243 = vadd.f32 %v137, %v242
    %v244 = vpop.f32.mrb[0].mxu0
    %v245 = vadd.f32 %v141, %v244
    %v246 = vpop.f32.mrb[0].mxu0
    %v247 = vpop.f32.mrb[0].mxu0
    %248 = vdwg.mxu0
    %v249 = vxor.u32 %v243, 2147483648
    %v250 = vxor.u32 %v245, 2147483648
    %v251 = vmul.f32 %v249, 1.442695
    %v252 = vpow.pop %v251
    %v253 = vmul.f32 %v250, 1.442695
    %v254 = vpow.pop %v253
    %v255 = vadd.f32 %v252, 1.0
    %v256 = vadd.f32 %v254, 1.0
    %v257 = vrcp.pop %v255
    %v258 = vmul.f32 1.0, %v257
    %v259 = vrcp.pop %v256
    %v260 = vmul.f32 1.0, %v259
    %v261 = vtanh.pop %v245
    %v262 = vld [vmem:[%s2] sm:$0x3]
    %v263 = vmul.f32 %v258, %v262
    %265 = vrot.lane.b32.xlu0 %v261, 64
    %v266 = vpop.permute.xlu0 %265
    %v268 = vmul.f32 %v258, %v266
    %270 = vrot.lane.b32.xlu0 %v268, 64
    %v271 = vpop.permute.xlu0 %270
    %v273 = vadd.f32 %v263, %v271
    %v274 = vtanh.pop %v273
    %276 = vrot.lane.b32.xlu0 %v274, 64
    %v277 = vpop.permute.xlu0 %276
    %v279 = vmul.f32 %v260, %v277
    %vm280 = vcmask 517120
    %281 = vst.msk [vmem:[%s8] sm:$0x3] %vm280, %v279
    %vm282 = vcmask 1041920
    %283 = vst.msk [vmem:[%s8] sm:$0x3] %vm282, %v273
    %v284 = vpack.c.bf16 %v279, %v279
    %v285 = vld [vmem:[#allocation7] sm:$0xf]
    %v286 = vld [vmem:[#allocation7 + $0x4] sm:$0xf]
    %v287 = vld [vmem:[#allocation7 + $0x8] sm:$0xf]
    %v288 = vld [vmem:[#allocation7 + $0xc] sm:$0xf]
    %v289 = vld [vmem:[#allocation7 + $0x10] sm:$0xf]
    %v290 = vld [vmem:[#allocation7 + $0x14] sm:$0xf]
    %v291 = vld [vmem:[#allocation7 + $0x18] sm:$0xf]
    %v292 = vld [vmem:[#allocation7 + $0x1c] sm:$0xf]
    %v293 = vld [vmem:[%s6] sm:$0x1]
    %v295 = vlaneseq
    %v296 = vshrl.u32 %v295, 7
    %v297 = vsub.s32 0, %v296
    %v298 = vrot.slane %v293, %v297
    %v308 = vunpack.c.l.b16 %v285
    %v309 = vunpack.c.l.b16 %v286
    %v310 = vunpack.c.l.b16 %v287
    %v311 = vunpack.c.l.b16 %v288
    %v312 = vunpack.c.l.b16 %v289
    %v313 = vunpack.c.l.b16 %v290
    %v314 = vunpack.c.l.b16 %v291
    %v315 = vunpack.c.l.b16 %v292
    %v316 = vpack.c.b16 %v309, %v308
    %v317 = vpack.c.b16 %v311, %v310
    %v318 = vpack.c.b16 %v313, %v312
    %v319 = vpack.c.b16 %v315, %v314
    %vm324 = vcmask 523264
    %v326 = vsel %vm324, %v284, 0
    %328 = vmatprep.subr.bf16.mxu0 0
    %329 = vmatpush1.bf16.msra.mxu0 %v316
    %330 = vmatprep.subr.bf16.mxu0 0
    %331 = vmatpush1.bf16.msra.mxu0 %v317
    %332 = vmatprep.subr.bf16.mxu0 0
    %333 = vmatpush1.bf16.msra.mxu0 %v318
    %334 = vmatprep.subr.bf16.mxu0 0
    %335 = vmatpush1.bf16.msra.mxu0 %v319
    %336 = vmatprep.subr.bf16.mxu0 0
    %337 = vmatpush1.bf16.msra.mxu0 0
    %338 = vmatprep.subr.bf16.mxu0 0
    %339 = vmatpush1.bf16.msra.mxu0 0
    %340 = vmatprep.subr.bf16.mxu0 0
    %341 = vmatpush1.bf16.msra.mxu0 0
    %342 = vmatprep.subr.bf16.mxu0 0
    %343 = vmatpush1.bf16.msra.mxu0 0
    %344 = vmatprep.subr.bf16.mxu0 0
    %345 = vmatpush1.bf16.msra.mxu0 0
    %346 = vmatprep.subr.bf16.mxu0 0
    %347 = vmatpush1.bf16.msra.mxu0 0
    %348 = vmatprep.subr.bf16.mxu0 0
    %349 = vmatpush1.bf16.msra.mxu0 0
    %350 = vmatprep.subr.bf16.mxu0 0
    %351 = vmatpush1.bf16.msra.mxu0 0
    %352 = vmatprep.subr.bf16.mxu0 0
    %353 = vmatpush1.bf16.msra.mxu0 0
    %354 = vmatprep.subr.bf16.mxu0 0
    %355 = vmatpush1.bf16.msra.mxu0 0
    %356 = vmatprep.subr.bf16.mxu0 0
    %357 = vmatpush1.bf16.msra.mxu0 0
    %358 = vmatprep.subr.bf16.mxu0 0
    %359 = vmatpush1.bf16.msra.mxu0 0
    %360 = vmatprep.mubr.bf16.mxu0 0
    %361 = vmatmul.mubr.bf16.gmra.mrb[0].mxu0 %v326
    %v362 = vpop.f32.mrb[0].mxu0
    %v363 = vadd.f32 %v298, %v362
    %v364 = vpop.f32.mrb[0].mxu0
    %v365 = vpop.f32.mrb[0].mxu0
    %v366 = vpop.f32.mrb[0].mxu0
    %367 = vdwg.mxu0
    %368 = vst [vmem:[#allocation8] sm:$0x3] %v363
    // Predicated region
    $region38: #{decoder_vanilla_forward.1} parent=1 // pred_check
      _
    $region39: #{decoder_vanilla_forward.1} parent=1 // pred_check_branch
      %370 = sbr.rel (0) target = $region41
    $region40: #{decoder_vanilla_forward.1} parent=1 // pred_region
      %s372 = ssub.s32 32, 32
      %373 = vsyncadd [#allocation5], %s372
      %s375 = sshll.u32 [#allocation8], 4
      %s376 = int_to_ptr.vmem [resolvable:$true] %s375
      %378 = dma.vmem_to_hbm [thread:$0]  %s376, 32, %s7, [#allocation5]
    $region41: #{decoder_vanilla_forward.1} parent=1 // pred_fallthru
      _
    // Predicated region
    $region42: #{decoder_vanilla_forward.1} parent=1 // pred_check
      _
    $region43: #{decoder_vanilla_forward.1} parent=1 // pred_check_branch
      %380 = sbr.rel (0) target = $region45
    $region44: #{decoder_vanilla_forward.1} parent=1 // pred_region
      _
    $region45: #{decoder_vanilla_forward.1} parent=1 // pred_fallthru
      _
    // Predicated region
    $region46: #{decoder_vanilla_forward.1} parent=1 // pred_check
      _
    $region47: #{decoder_vanilla_forward.1} parent=1 // pred_check_branch
      %382 = sbr.rel (0) target = $region49
    $region48: #{decoder_vanilla_forward.1} parent=1 // pred_region
      %383 = dma.done [#allocation5], 32
    $region49: #{decoder_vanilla_forward.1} parent=1 // pred_fallthru
      _
    // Predicated region
    $region50: #{decoder_vanilla_forward.1} parent=1 // pred_check
      _
    $region51: #{decoder_vanilla_forward.1} parent=1 // pred_check_branch
      %385 = sbr.rel (0) target = $region53
    $region52: #{decoder_vanilla_forward.1} parent=1 // pred_region
      _
    $region53: #{decoder_vanilla_forward.1} parent=1 // pred_fallthru
      _
    %386 = vsyncpa [#allocation4], 1
    %387 = vsyncpa [#allocation5], 1
    %388 = vsyncpa [#allocation6], 1

</llo_original>
